<compile_context>
chip_gen: v6e
topology: v6e:2x2x1
jax: 0.10.0
libtpu: 0.0.40
codegen_flags: <defaults>
</compile_context>

<pallas_src>
import math

import jax
import jax.numpy as jnp
from jax.experimental import pallas as pl
from jax.experimental.pallas import tpu as pltpu


def _psc_kernel(phase_ref, c_ref, mu_ref, out_ref):
    # phase_ref, c_ref: (M, 1) f32; mu_ref: (1, tile_n) f32; out_ref: (M, tile_n) f32.
    d = mu_ref[...] - phase_ref[...]                    # (M, tile_n) via broadcast
    d = jnp.where(d > math.pi, d - 2.0 * math.pi, d)    # wrap into (-pi, pi]
    d = jnp.where(d < -math.pi, d + 2.0 * math.pi, d)
    # exp(-0.5 * d^2 / (sqrt(2)*a)^2) == exp(c * d * d) with c = -0.25 / a^2 (prefolded).
    out_ref[...] = jnp.exp(c_ref[...] * d * d)


def psc_forward(x, mu_g, a_gs, lambda_gs, Lphase, *, block_elems=1 << 20):
    """Pallas equivalent of PSC.forward(x) with noiseFlag=False.

    x: scalar stimulus; mu_g: (n_g,) preferred phases; a_gs, lambda_gs: (M,)
    per-module tuning widths / spatial periods.  Returns (M, n_g) f32.
    """
    a_gs = jnp.asarray(a_gs, jnp.float32)
    lambda_gs = jnp.asarray(lambda_gs, jnp.float32)
    mu_g = jnp.asarray(mu_g, jnp.float32)
    M = a_gs.shape[0]
    n_g = mu_g.shape[0]

    # Per-module scalar precompute (tiny, stays in the XLA wrapper).
    x32 = jnp.asarray(x, jnp.float32)
    phase = (x32 % lambda_gs) * Lphase / lambda_gs      # (M,)
    c = -0.25 / (a_gs * a_gs)                           # folds -0.5 / (sqrt(2)*a)^2

    phase2 = phase.reshape(M, 1)
    c2 = c.reshape(M, 1)
    mu2 = mu_g.reshape(1, n_g)
    out_shape = jax.ShapeDtypeStruct((M, n_g), jnp.float32)

    if M * n_g <= block_elems or n_g % 128 != 0:
        # Single grid point: whole arrays live in VMEM as full blocks
        # (full-array blocks are exempt from the (8,128) divisibility rule).
        return pl.pallas_call(_psc_kernel, out_shape=out_shape)(phase2, c2, mu2)

    # Large-n_g fallback: tile the lane axis with big blocks, parallel grid.
    tile_n = 128
    t = 128
    while t <= n_g:
        if n_g % t == 0 and M * t <= block_elems:
            tile_n = t
        t *= 2

    return pl.pallas_call(
        _psc_kernel,
        out_shape=out_shape,
        grid=(n_g // tile_n,),
        in_specs=[
            pl.BlockSpec((M, 1), lambda j: (0, 0)),        # phase (broadcast to all tiles)
            pl.BlockSpec((M, 1), lambda j: (0, 0)),        # c
            pl.BlockSpec((1, tile_n), lambda j: (0, j)),   # mu_g lane tile
        ],
        out_specs=pl.BlockSpec((M, tile_n), lambda j: (0, j)),
        compiler_params=pltpu.CompilerParams(
            dimension_semantics=("parallel",)),
    )(phase2, c2, mu2)
    # TODO(synk): noiseFlag=True path (per-module phase noise + per-neuron rate
    # noise) could be added in-kernel with pltpu.prng_seed + pltpu.stateful_normal
    # on the same (M, tile_n) block to keep the op single-pass.


if __name__ == "__main__":
    # Deterministic parameter setup (mirrors PSC.__init__), small shapes.
    M = 8                       # number of grid modules (sublane axis)
    n_g = 128                   # neurons per module (lane axis)
    Lphase = 2.0 * math.pi
    lambda_gs = 0.3 * (1.4 ** jnp.arange(M, dtype=jnp.float32))   # spatial periods
    a_gs = 0.4 + 0.05 * jnp.arange(M, dtype=jnp.float32)          # tuning widths
    # mu_g = linspace(0, Lphase, n_g + 1)[:-1]
    mu_g = jnp.linspace(0.0, Lphase, n_g + 1, dtype=jnp.float32)[:-1]

    # Deterministic example stimulus.
    key = jax.random.PRNGKey(0)
    x = jax.random.uniform(key, (), minval=0.0, maxval=10.0, dtype=jnp.float32)

    out = jax.block_until_ready(psc_forward(x, mu_g, a_gs, lambda_gs, Lphase))

    # Pure-JAX reference (same math as PSC.forward, noiseFlag=False).
    phase_ref = (x % lambda_gs) * Lphase / lambda_gs
    d = mu_g[None, :] - phase_ref[:, None]
    d = jnp.where(d > math.pi, d - 2.0 * math.pi, d)
    d = jnp.where(d < -math.pi, d + 2.0 * math.pi, d)
    ref = 1.0 * jnp.exp(-0.5 * d ** 2 / (math.sqrt(2) * a_gs[:, None]) ** 2)

    assert out.shape == (M, n_g) and out.dtype == jnp.float32
    assert jnp.allclose(out, ref, atol=1e-6, rtol=1e-5)

    print("KERNEL_OK")
</pallas_src>

<mosaic_0001>
module attributes {stable_mosaic.version = 11 : i64} {
  func.func @_psc_kernel(%arg0: memref<8x1xf32, #tpu.memory_space<vmem>>, %arg1: memref<8x1xf32, #tpu.memory_space<vmem>>, %arg2: memref<1x128xf32, #tpu.memory_space<vmem>>, %arg3: memref<8x128xf32, #tpu.memory_space<vmem>>) attributes {dimension_semantics = [], scalar_prefetch = 0 : i64, scratch_operands = 0 : i64, tpu.core_type = #tpu.core_type<tc>} {
    %c0 = arith.constant 0 : index
    %c0_0 = arith.constant 0 : index
    %0 = vector.load %arg2[%c0, %c0_0] : memref<1x128xf32, #tpu.memory_space<vmem>>, vector<1x128xf32>
    %c0_1 = arith.constant 0 : index
    %c0_2 = arith.constant 0 : index
    %1 = vector.load %arg0[%c0_1, %c0_2] : memref<8x1xf32, #tpu.memory_space<vmem>>, vector<8x1xf32>
    %2 = vector.broadcast %0 : vector<1x128xf32> to vector<8x128xf32>
    %3 = vector.broadcast %1 : vector<8x1xf32> to vector<8x128xf32>
    %4 = arith.subf %2, %3 : vector<8x128xf32>
    %cst = arith.constant 3.14159274 : f32
    %5 = vector.broadcast %cst : f32 to vector<8x128xf32>
    %6 = arith.cmpf ogt, %4, %5 : vector<8x128xf32>
    %cst_3 = arith.constant 6.28318548 : f32
    %7 = vector.broadcast %cst_3 : f32 to vector<8x128xf32>
    %8 = arith.subf %4, %7 : vector<8x128xf32>
    %9 = arith.select %6, %8, %4 : vector<8x128xi1>, vector<8x128xf32>
    %cst_4 = arith.constant -3.14159274 : f32
    %10 = vector.broadcast %cst_4 : f32 to vector<8x128xf32>
    %11 = arith.cmpf olt, %9, %10 : vector<8x128xf32>
    %cst_5 = arith.constant 6.28318548 : f32
    %12 = vector.broadcast %cst_5 : f32 to vector<8x128xf32>
    %13 = arith.addf %9, %12 : vector<8x128xf32>
    %14 = arith.select %11, %13, %9 : vector<8x128xi1>, vector<8x128xf32>
    %c0_6 = arith.constant 0 : index
    %c0_7 = arith.constant 0 : index
    %15 = vector.load %arg1[%c0_6, %c0_7] : memref<8x1xf32, #tpu.memory_space<vmem>>, vector<8x1xf32>
    %16 = vector.broadcast %15 : vector<8x1xf32> to vector<8x128xf32>
    %17 = arith.mulf %16, %14 : vector<8x128xf32>
    %18 = arith.mulf %17, %14 : vector<8x128xf32>
    %19 = math.exp %18 : vector<8x128xf32>
    %c0_8 = arith.constant 0 : index
    %c0_9 = arith.constant 0 : index
    %20 = vector.load %arg3[%c0_8, %c0_9] : memref<8x128xf32, #tpu.memory_space<vmem>>, vector<8x128xf32>
    tpu.vector_store %arg3[%c0_8, %c0_9], %19 {strides = array<i32>} : memref<8x128xf32, #tpu.memory_space<vmem>>, vector<8x128xf32>,
    return
  }
}

</mosaic_0001>

<llo_original>
// kernel: tpu_custom_call.1
$region0: #{tpu_custom_call.1}
  #allocation0 [shape = 'u32[]', space=smem, size = 0x4, offset = 0x4, fixed_abs, tag = 'smem constant byte address 0x4 - core index']
  #allocation1 [shape = 'u32[144,128]{1,0:T(1,128)}', space=vmem, size = 0x12000, scoped, tag = 'internal scratch']
  %s0 = inlined_call_operand.vmem [shape: f32[8,1], index: 0, kind: input, shape index: {}]
  %s1 = inlined_call_operand.vmem [shape: f32[8,1], index: 1, kind: input, shape index: {}]
  %s2 = inlined_call_operand.vmem [shape: f32[1,128], index: 2, kind: input, shape index: {}]
  %s3 = inlined_call_operand.hbm [shape: f32[8,128], index: 3, kind: output, shape index: {}]
  %s4 = sld [smem:[#allocation0]]
  $region22: #{tpu_custom_call.1} parent=0
    _
  %s6 = ssub.s32 1, %s4
  %s7 = scalar_select 0, %s6, %s4
  $region1: #{tpu_custom_call.1} parent=0
    #allocation2 [shape = 'u8[4096]{0}', space=vmem, size = 0x1000, scoped, tag = 'output window, operand 0, single buffered']
    #allocation3 [shape = 's32[1]{0}', space=sflag, size = 0x4, scoped, tag = 'scoped memory for tpu_custom_call.1']
    %8 = vsyncpa [#allocation3], 0
    // Predicated region
    $region2: #{tpu_custom_call.1} parent=1 // pred_check
      _
    $region3: #{tpu_custom_call.1} parent=1 // pred_check_branch
      %10 = sbr.rel (0) target = $region5
    $region4: #{tpu_custom_call.1} parent=1 // pred_region
      _
    $region5: #{tpu_custom_call.1} parent=1 // pred_fallthru
      _
    // Predicated region
    $region6: #{tpu_custom_call.1} parent=1 // pred_check
      _
    $region7: #{tpu_custom_call.1} parent=1 // pred_check_branch
      %12 = sbr.rel (0) target = $region9
    $region8: #{tpu_custom_call.1} parent=1 // pred_region
      _
    $region9: #{tpu_custom_call.1} parent=1 // pred_fallthru
      _
    // Predicated region
    $region10: #{tpu_custom_call.1} parent=1 // pred_check
      _
    $region11: #{tpu_custom_call.1} parent=1 // pred_check_branch
      %14 = sbr.rel (0) target = $region13
    $region12: #{tpu_custom_call.1} parent=1 // pred_region
      _
    $region13: #{tpu_custom_call.1} parent=1 // pred_fallthru
      _
    %v15 = vld [vmem:[%s2] sm:$0x1]
    %v16 = vld [vmem:[%s0] sm:$0xff]
    %v18 = vlaneseq
    %v19 = vshrl.u32 %v18, 7
    %v20 = vsub.s32 0, %v19
    %v21 = vrot.slane %v15, %v20
    %24 = vset.pattern.permute.xlu0 0
    %25 = vperm.xlu0 %24, %v16
    %v26 = vpop.permute.xlu0 %25
    %v28 = vsub.f32 %v21, %v26
    %vm29 = vcmp.gt.f32.partialorder %v28, 3.1415927
    %v30 = vsub.f32 %v28, 6.2831855
    %v31 = vsel %vm29, %v30, %v28
    %vm32 = vcmp.lt.f32.partialorder %v31, -3.1415927
    %v33 = vadd.f32 %v31, 6.2831855
    %v34 = vsel %vm32, %v33, %v31
    %v35 = vld [vmem:[%s1] sm:$0xff]
    %37 = vset.pattern.permute.xlu0 0
    %38 = vperm.xlu0 %37, %v35
    %v39 = vpop.permute.xlu0 %38
    %v41 = vmul.f32 %v39, %v34
    %v42 = vmul.f32 %v41, %v34
    %v43 = vmul.f32 %v42, 1.442695
    %v44 = vpow.pop %v43
    %45 = vst [vmem:[#allocation2] sm:$0xff] %v44
    // Predicated region
    $region14: #{tpu_custom_call.1} parent=1 // pred_check
      _
    $region15: #{tpu_custom_call.1} parent=1 // pred_check_branch
      %47 = sbr.rel (0) target = $region17
    $region16: #{tpu_custom_call.1} parent=1 // pred_region
      %s49 = ssub.s32 128, 128
      %50 = vsyncadd [#allocation3], %s49
      %s52 = sshll.u32 [#allocation2], 4
      %s53 = int_to_ptr.vmem [resolvable:$true] %s52
      %55 = dma.vmem_to_hbm [thread:$0]  %s53, 128, %s3, [#allocation3]
    $region17: #{tpu_custom_call.1} parent=1 // pred_fallthru
      _
    // Predicated region
    $region18: #{tpu_custom_call.1} parent=1 // pred_check
      _
    $region19: #{tpu_custom_call.1} parent=1 // pred_check_branch
      %57 = sbr.rel (0) target = $region21
    $region20: #{tpu_custom_call.1} parent=1 // pred_region
      %58 = dma.done [#allocation3], 128
    $region21: #{tpu_custom_call.1} parent=1 // pred_fallthru
      _
    %59 = vsyncpa [#allocation3], 1

</llo_original>
